<compile_context>
chip_gen: v6e
topology: v6e:2x2x1
jax: 0.10.0
libtpu: 0.0.40
codegen_flags: <defaults>
</compile_context>

<pallas_src>
import functools

import numpy as np
import jax
import jax.numpy as jnp
from jax.experimental import pallas as pl
from jax.experimental.pallas import tpu as pltpu


# --------------------------- static layout planning --------------------------

def _conv_layout(Cin, Cout, K, s, p, Lin, B):
    """Polyphase / guarded-slab layout constants for one ConvTranspose1d."""
    Lout = (Lin - 1) * s - 2 * p + K
    Lq = -(-Lout // s)                                     # outputs per phase
    ds = sorted({(k - p - r) // s
                 for r in range(s) for k in range(K) if (k - p - r) % s == 0})
    dmin, dmax = ds[0], ds[-1]                             # input-shift range
    GL = max(dmax, 0)                                      # left guard (zeros)
    GR = max(Lq - Lin - dmin, 0)                           # right guard (zeros)
    SEG = GL + Lin + GR                                    # per-batch segment
    Wsl = (B - 1) * SEG + Lq                               # phase-domain width
    return dict(Cin=Cin, Cout=Cout, K=K, s=s, p=p, Lin=Lin, Lout=Lout, Lq=Lq,
                dmin=dmin, dmax=dmax, GL=GL, GR=GR, SEG=SEG, Wsl=Wsl)


def prepack_params(params, batch):
    """Pack PyTorch-layout params into kernel operands (done once, host-side)."""
    F = params["features"]
    B = batch
    L1 = _conv_layout(F, F, 4, 2, 2, 32, B)
    L2 = _conv_layout(F, F, 8, 4, 1, L1["Lout"], B)
    L3 = _conv_layout(F, 4, 10, 4, 3, L2["Lout"], B)

    def w_all(W, lay):
        # (s*Cout, nd*Cin): every tap of every phase in one matmul operand.
        Cin, Cout, K, s, p = lay["Cin"], lay["Cout"], lay["K"], lay["s"], lay["p"]
        nd = lay["dmax"] - lay["dmin"] + 1
        out = np.zeros((s * Cout, nd * Cin), np.float32)
        Wn = np.asarray(W, np.float32)                      # (Cin, Cout, K)
        for r in range(s):
            for i, d in enumerate(range(lay["dmin"], lay["dmax"] + 1)):
                k = p + r + d * s
                if 0 <= k < K:
                    out[r * Cout:(r + 1) * Cout, i * Cin:(i + 1) * Cin] = Wn[:, :, k].T
        return out

    def e_cat(lay, nxt):
        # 0/1 scatter: only used for the tiny layer1 -> layer2 interleave (~65 KB).
        s, Lq, Lout, SEG, Wsl = lay["s"], lay["Lq"], lay["Lout"], lay["SEG"], lay["Wsl"]
        SEGo, GLo = nxt["SEG"], nxt["GL"]
        E = np.zeros((s * Wsl, B * SEGo), np.float32)
        for r in range(s):
            for b in range(B):
                for q in range(Lq):
                    lo = q * s + r
                    if lo < Lout:
                        E[r * Wsl + b * SEG + q, b * SEGo + GLo + lo] = 1.0
        return E

    def bias_slab(bias, lay, nxt):
        Cout, Lout = lay["Cout"], lay["Lout"]
        SEGo, GLo = nxt["SEG"], nxt["GL"]
        out = np.zeros((Cout, B * SEGo), np.float32)
        bn = np.asarray(bias, np.float32)
        for b in range(B):
            out[:, b * SEGo + GLo: b * SEGo + GLo + Lout] = bn[:, None]
        return out

    # ---- layer-2 validity mask (phase-major): zero junk / out-of-range cols --
    s2, C2, SEG2, Lq2, Lout2, Wsl2 = (L2["s"], L2["Cout"], L2["SEG"], L2["Lq"],
                                      L2["Lout"], L2["Wsl"])
    mask2 = np.zeros((s2 * C2, Wsl2), np.float32)
    for col in range(Wsl2):
        b = col // SEG2
        q = col - b * SEG2
        if q < Lq2:
            for r in range(s2):
                if q * s2 + r < Lout2:
                    mask2[r * C2:(r + 1) * C2, col] = 1.0

    # ---- layer-3 weights composed onto layer-2's phase-major activations -----
    # rep3[(u*s3+r3)*C3 + co, b*SEG2 + v] =
    #   sum_{d3,ci} a2[ci, (s2*v+u) - d3] * W3[ci, co, p3 + r3 + s3*d3]
    # where a2[., l2] lives in p_act2 at row-block (l2 % s2), column (l2 // s2),
    # i.e. a column shift of delta = (u - d3) // s2 in {-1, 0, +1}.
    s3, K3, p3, C3 = L3["s"], L3["K"], L3["p"], L3["Cout"]
    R3 = s2 * s3 * C3
    W3n = np.asarray(params["w3"], np.float32)              # (Cin, C3, K3)
    wc3 = np.zeros((3, R3, s2 * C2), np.float32)            # shift order [-1,0,+1]
    for u in range(s2):
        for r3 in range(s3):
            phi3 = u * s3 + r3
            for d3 in range(L3["dmin"], L3["dmax"] + 1):
                k = p3 + r3 + d3 * s3
                if 0 <= k < K3:
                    delta = (u - d3) // s2
                    r2 = (u - d3) % s2
                    assert -1 <= delta <= 1
                    wc3[delta + 1,
                        phi3 * C3:(phi3 + 1) * C3,
                        r2 * C2:(r2 + 1) * C2] += W3n[:, :, k].T
    wc3 = wc3.reshape(3 * R3, s2 * C2)

    arrs = dict(
        wlinT=jnp.asarray(np.asarray(params["lin_w"], np.float32).T),        # (zdim, 32F)
        blin=jnp.asarray(np.asarray(params["lin_b"], np.float32)[None, :]),  # (1, 32F)
        w1=jnp.asarray(w_all(params["w1"], L1)),                             # (16, 16)
        e1=jnp.asarray(e_cat(L1, L2)),                                       # (126, 130)
        bias1=jnp.asarray(bias_slab(params["b1"], L1, L2)),                  # (8, 130)
        w2=jnp.asarray(w_all(params["w2"], L2)),                             # (32, 24)
        b2r=jnp.asarray(np.tile(np.asarray(params["b2"], np.float32), s2)[:, None]),
        mask2=jnp.asarray(mask2),                                            # (32, 128)
        wc3=jnp.asarray(wc3),                                                # (192, 32)
        b3r=jnp.asarray(np.tile(np.asarray(params["b3"], np.float32),
                                s2 * s3)[:, None]),                          # (64, 1)
    )
    cfg = dict(B=B, F=F, layers=(L1, L2, L3), R3=R3, per=s2 * s3)
    return arrs, cfg


# -------------------------------- fused kernel --------------------------------

def _generator_kernel(x_ref, wlinT_ref, blin_ref, w1_ref, e1_ref, bias1_ref,
                      w2_ref, b2r_ref, mask2_ref, wc3_ref, b3r_ref, o_ref, *, cfg):
    B, F = cfg["B"], cfg["F"]
    L1, L2, _ = cfg["layers"]
    R3 = cfg["R3"]
    f32 = jnp.float32

    def leaky(v):
        return jnp.where(v >= 0, v, 0.2 * v)

    def conv_phases(act, w, lay):
        # All taps x all phases of one ConvTranspose1d in a single MXU matmul.
        GL, Wsl = lay["GL"], lay["Wsl"]
        xall = jnp.concatenate(
            [act[:, GL - d: GL - d + Wsl]
             for d in range(lay["dmin"], lay["dmax"] + 1)], axis=0)
        return jnp.dot(w, xall, preferred_element_type=f32)

    # ---- Linear(z_dim, 32F): one MXU matmul for the whole batch ----
    lin = (jnp.dot(x_ref[...], wlinT_ref[...], preferred_element_type=f32)
           + blin_ref[...])                                    # (B, 32F)

    # ---- Unflatten(1, (-1, 32)) -> batch-folded slab (F, B*32) ----
    # (kept as small slices+concats: a general (B,F*L)->(F,B*L) relayout has no
    #  reliably-lowerable single reshape/transpose form inside a Mosaic kernel)
    Lin1 = L1["Lin"]
    rows = [jnp.concatenate([lin[b:b + 1, f * Lin1:(f + 1) * Lin1]
                             for b in range(B)], axis=1)
            for f in range(F)]
    slab1 = jnp.concatenate(rows, axis=0)                      # (F, B*32)

    # ---- ConvTranspose1d(F,F,4,s=2,p=2): phases + small interleave + LeakyReLU
    p1 = conv_phases(slab1, w1_ref[...], L1)                   # (s1*F, Wsl1)
    pcols1 = jnp.concatenate(
        [p1[r * F:(r + 1) * F, :] for r in range(L1["s"])], axis=1)
    slab2 = leaky(jnp.dot(pcols1, e1_ref[...], preferred_element_type=f32)
                  + bias1_ref[...])                            # (F, B*SEG2)

    # ---- ConvTranspose1d(F,F,8,s=4,p=1): kept phase-major (no interleave/e2)
    p2 = conv_phases(slab2, w2_ref[...], L2)                   # (s2*F, Wsl2)
    p2 = leaky(p2 + b2r_ref[...]) * mask2_ref[...]             # zero junk cols

    # ---- ConvTranspose1d(F,4,10,s=4,p=3) + Tanh via composed polyphase weights
    Wsl2 = L2["Wsl"]
    zc = jnp.zeros((p2.shape[0], 1), f32)
    op_m1 = jnp.concatenate([zc, p2[:, :Wsl2 - 1]], axis=1)    # reads column j-1
    op_p1 = jnp.concatenate([p2[:, 1:], zc], axis=1)           # reads column j+1
    wc3 = wc3_ref[...]                                         # (3*R3, s2*F)
    acc = jnp.dot(wc3[R3:2 * R3, :], p2, preferred_element_type=f32)
    acc = acc + jnp.dot(wc3[0:R3, :], op_m1, preferred_element_type=f32)
    acc = acc + jnp.dot(wc3[2 * R3:3 * R3, :], op_p1, preferred_element_type=f32)

    # Lane-dense single store: (R3, Wsl2) = (64, 128) -> exact (8,128) multiples.
    o_ref[...] = jnp.tanh(acc + b3r_ref[...])


# --------------------------------- wrapper -------------------------------------

def make_generator(arrs, cfg):
    _, L2, L3 = cfg["layers"]
    B = cfg["B"]
    R3, per = cfg["R3"], cfg["per"]
    SEG2, Wsl2 = L2["SEG"], L2["Wsl"]
    C3, Lout3 = L3["Cout"], L3["Lout"]
    Vq = -(-Lout3 // per)                          # composed columns per batch
    kernel = functools.partial(_generator_kernel, cfg=cfg)
    n_in = 11

    @jax.jit
    def fwd(x, a):
        rep3 = pl.pallas_call(
            kernel,
            out_shape=jax.ShapeDtypeStruct((R3, Wsl2), jnp.float32),
            in_specs=[pl.BlockSpec(memory_space=pltpu.MemorySpace.VMEM)] * n_in,
            out_specs=pl.BlockSpec(memory_space=pltpu.MemorySpace.VMEM),
        )(x, a["wlinT"], a["blin"], a["w1"], a["e1"], a["bias1"],
          a["w2"], a["b2r"], a["mask2"], a["wc3"], a["b3r"])
        # Tiny XLA epilogue (32 KB): un-permute the composed phases per batch.
        outs = []
        for b in range(B):
            blk = rep3[:, b * SEG2: b * SEG2 + Vq]             # (R3, Vq)
            blk = blk.reshape(per, C3, Vq)                     # (phi3, co, v)
            blk = jnp.transpose(blk, (1, 2, 0)).reshape(C3, Vq * per)
            outs.append(blk[:, :Lout3])
        return jnp.stack(outs, axis=0)                         # (B, 4, 1000)

    return lambda x: fwd(x, arrs)


# --------------------------- deterministic params ------------------------------

def init_params(key, z_dim, features):
    ks = jax.random.split(key, 8)
    s = 0.1
    return {
        "features": features,
        # nn.Linear(z_dim, 32*features): weight (32F, z_dim), bias (32F,)
        "lin_w": s * jax.random.normal(ks[0], (32 * features, z_dim), jnp.float32),
        "lin_b": s * jax.random.normal(ks[1], (32 * features,), jnp.float32),
        # nn.ConvTranspose1d weight layout: (Cin, Cout, K)
        "w1": s * jax.random.normal(ks[2], (features, features, 4), jnp.float32),
        "b1": s * jax.random.normal(ks[3], (features,), jnp.float32),
        "w2": s * jax.random.normal(ks[4], (features, features, 8), jnp.float32),
        "b2": s * jax.random.normal(ks[5], (features,), jnp.float32),
        "w3": s * jax.random.normal(ks[6], (features, 4, 10), jnp.float32),
        "b3": s * jax.random.normal(ks[7], (4,), jnp.float32),
    }


# ------------------------------ numpy reference --------------------------------

def _ref_convt1d(x, W, b, stride, padding):
    B, Cin, Lin = x.shape
    _, Cout, K = W.shape
    Lout = (Lin - 1) * stride - 2 * padding + K
    out = np.tile(np.asarray(b, np.float64)[None, :, None], (B, 1, Lout))
    x = np.asarray(x, np.float64)
    W = np.asarray(W, np.float64)
    for li in range(Lin):
        for k in range(K):
            lo = li * stride + k - padding
            if 0 <= lo < Lout:
                out[:, :, lo] += x[:, :, li] @ W[:, :, k]
    return out


def ref_forward(params, x):
    x = np.asarray(x, np.float64)
    W = np.asarray(params["lin_w"], np.float64)
    b = np.asarray(params["lin_b"], np.float64)
    h = x @ W.T + b
    h = h.reshape(x.shape[0], params["features"], 32)
    h = _ref_convt1d(h, params["w1"], params["b1"], 2, 2)
    h = np.where(h >= 0, h, 0.2 * h)
    h = _ref_convt1d(h, params["w2"], params["b2"], 4, 1)
    h = np.where(h >= 0, h, 0.2 * h)
    h = _ref_convt1d(h, params["w3"], params["b3"], 4, 3)
    return np.tanh(h)


# ----------------------------------- main ---------------------------------------

if __name__ == "__main__":
    z_dim, features, batch = 16, 8, 2
    key = jax.random.PRNGKey(0)
    pkey, xkey = jax.random.split(key)
    params = init_params(pkey, z_dim, features)
    x = jax.random.normal(xkey, (batch, z_dim), jnp.float32)

    arrs, cfg = prepack_params(params, batch)
    generator = make_generator(arrs, cfg)

    out = jax.block_until_ready(generator(x))

    # Output length: 32 -> 62 -> 250 -> 1000 ; channels -> 4
    assert out.shape == (batch, 4, 1000), out.shape

    ref = ref_forward(params, x)
    np.testing.assert_allclose(np.asarray(out), ref, atol=1e-3, rtol=1e-3)

    print("KERNEL_OK")
</pallas_src>

<mosaic_0001>
module attributes {stable_mosaic.version = 11 : i64} {
  func.func @_generator_kernel(%arg0: memref<2x16xf32, #tpu.memory_space<vmem>>, %arg1: memref<16x256xf32, #tpu.memory_space<vmem>>, %arg2: memref<1x256xf32, #tpu.memory_space<vmem>>, %arg3: memref<16x16xf32, #tpu.memory_space<vmem>>, %arg4: memref<126x130xf32, #tpu.memory_space<vmem>>, %arg5: memref<8x130xf32, #tpu.memory_space<vmem>>, %arg6: memref<32x24xf32, #tpu.memory_space<vmem>>, %arg7: memref<32x1xf32, #tpu.memory_space<vmem>>, %arg8: memref<32x128xf32, #tpu.memory_space<vmem>>, %arg9: memref<192x32xf32, #tpu.memory_space<vmem>>, %arg10: memref<64x1xf32, #tpu.memory_space<vmem>>, %arg11: memref<64x128xf32, #tpu.memory_space<vmem>>) attributes {dimension_semantics = [], scalar_prefetch = 0 : i64, scratch_operands = 0 : i64, tpu.core_type = #tpu.core_type<tc>} {
    %c0 = arith.constant 0 : index
    %c0_0 = arith.constant 0 : index
    %0 = vector.load %arg0[%c0, %c0_0] : memref<2x16xf32, #tpu.memory_space<vmem>>, vector<2x16xf32>
    %c0_1 = arith.constant 0 : index
    %c0_2 = arith.constant 0 : index
    %1 = vector.load %arg1[%c0_1, %c0_2] : memref<16x256xf32, #tpu.memory_space<vmem>>, vector<16x256xf32>
    %cst = arith.constant dense<0.000000e+00> : vector<2x256xf32>
    %2 = tpu.matmul %0, %1, %cst {dimension_numbers = #tpu.dot_dimension_numbers<[1], [0], [0], [1], [0, 0, 1, 1], [], []>} : vector<2x16xf32>, vector<16x256xf32>, vector<2x256xf32> -> vector<2x256xf32>
    %c0_3 = arith.constant 0 : index
    %c0_4 = arith.constant 0 : index
    %3 = vector.load %arg2[%c0_3, %c0_4] : memref<1x256xf32, #tpu.memory_space<vmem>>, vector<1x256xf32>
    %4 = vector.broadcast %3 : vector<1x256xf32> to vector<2x256xf32>
    %5 = arith.addf %2, %4 : vector<2x256xf32>
    %6 = vector.extract_strided_slice %5 {offsets = [0, 0], sizes = [1, 32], strides = [1, 1]} : vector<2x256xf32> to vector<1x32xf32>
    %7 = vector.extract_strided_slice %5 {offsets = [1, 0], sizes = [1, 32], strides = [1, 1]} : vector<2x256xf32> to vector<1x32xf32>
    %8 = tpu.concatenate %6, %7 in 1 : vector<1x32xf32>, vector<1x32xf32> -> vector<1x64xf32>
    %9 = vector.extract_strided_slice %5 {offsets = [0, 32], sizes = [1, 32], strides = [1, 1]} : vector<2x256xf32> to vector<1x32xf32>
    %10 = vector.extract_strided_slice %5 {offsets = [1, 32], sizes = [1, 32], strides = [1, 1]} : vector<2x256xf32> to vector<1x32xf32>
    %11 = tpu.concatenate %9, %10 in 1 : vector<1x32xf32>, vector<1x32xf32> -> vector<1x64xf32>
    %12 = vector.extract_strided_slice %5 {offsets = [0, 64], sizes = [1, 32], strides = [1, 1]} : vector<2x256xf32> to vector<1x32xf32>
    %13 = vector.extract_strided_slice %5 {offsets = [1, 64], sizes = [1, 32], strides = [1, 1]} : vector<2x256xf32> to vector<1x32xf32>
    %14 = tpu.concatenate %12, %13 in 1 : vector<1x32xf32>, vector<1x32xf32> -> vector<1x64xf32>
    %15 = vector.extract_strided_slice %5 {offsets = [0, 96], sizes = [1, 32], strides = [1, 1]} : vector<2x256xf32> to vector<1x32xf32>
    %16 = vector.extract_strided_slice %5 {offsets = [1, 96], sizes = [1, 32], strides = [1, 1]} : vector<2x256xf32> to vector<1x32xf32>
    %17 = tpu.concatenate %15, %16 in 1 : vector<1x32xf32>, vector<1x32xf32> -> vector<1x64xf32>
    %18 = vector.extract_strided_slice %5 {offsets = [0, 128], sizes = [1, 32], strides = [1, 1]} : vector<2x256xf32> to vector<1x32xf32>
    %19 = vector.extract_strided_slice %5 {offsets = [1, 128], sizes = [1, 32], strides = [1, 1]} : vector<2x256xf32> to vector<1x32xf32>
    %20 = tpu.concatenate %18, %19 in 1 : vector<1x32xf32>, vector<1x32xf32> -> vector<1x64xf32>
    %21 = vector.extract_strided_slice %5 {offsets = [0, 160], sizes = [1, 32], strides = [1, 1]} : vector<2x256xf32> to vector<1x32xf32>
    %22 = vector.extract_strided_slice %5 {offsets = [1, 160], sizes = [1, 32], strides = [1, 1]} : vector<2x256xf32> to vector<1x32xf32>
    %23 = tpu.concatenate %21, %22 in 1 : vector<1x32xf32>, vector<1x32xf32> -> vector<1x64xf32>
    %24 = vector.extract_strided_slice %5 {offsets = [0, 192], sizes = [1, 32], strides = [1, 1]} : vector<2x256xf32> to vector<1x32xf32>
    %25 = vector.extract_strided_slice %5 {offsets = [1, 192], sizes = [1, 32], strides = [1, 1]} : vector<2x256xf32> to vector<1x32xf32>
    %26 = tpu.concatenate %24, %25 in 1 : vector<1x32xf32>, vector<1x32xf32> -> vector<1x64xf32>
    %27 = vector.extract_strided_slice %5 {offsets = [0, 224], sizes = [1, 32], strides = [1, 1]} : vector<2x256xf32> to vector<1x32xf32>
    %28 = vector.extract_strided_slice %5 {offsets = [1, 224], sizes = [1, 32], strides = [1, 1]} : vector<2x256xf32> to vector<1x32xf32>
    %29 = tpu.concatenate %27, %28 in 1 : vector<1x32xf32>, vector<1x32xf32> -> vector<1x64xf32>
    %30 = tpu.concatenate %8, %11, %14, %17, %20, %23, %26, %29 in 0 : vector<1x64xf32>, vector<1x64xf32>, vector<1x64xf32>, vector<1x64xf32>, vector<1x64xf32>, vector<1x64xf32>, vector<1x64xf32>, vector<1x64xf32> -> vector<8x64xf32>
    %c0_5 = arith.constant 0 : index
    %c0_6 = arith.constant 0 : index
    %31 = vector.load %arg3[%c0_5, %c0_6] : memref<16x16xf32, #tpu.memory_space<vmem>>, vector<16x16xf32>
    %32 = vector.extract_strided_slice %30 {offsets = [0, 1], sizes = [8, 63], strides = [1, 1]} : vector<8x64xf32> to vector<8x63xf32>
    %33 = vector.extract_strided_slice %30 {offsets = [0, 0], sizes = [8, 63], strides = [1, 1]} : vector<8x64xf32> to vector<8x63xf32>
    %34 = tpu.concatenate %32, %33 in 0 : vector<8x63xf32>, vector<8x63xf32> -> vector<16x63xf32>
    %cst_7 = arith.constant dense<0.000000e+00> : vector<16x63xf32>
    %35 = tpu.matmul %31, %34, %cst_7 {dimension_numbers = #tpu.dot_dimension_numbers<[1], [0], [0], [1], [0, 0, 1, 1], [], []>} : vector<16x16xf32>, vector<16x63xf32>, vector<16x63xf32> -> vector<16x63xf32>
    %36 = vector.extract_strided_slice %35 {offsets = [0, 0], sizes = [8, 63], strides = [1, 1]} : vector<16x63xf32> to vector<8x63xf32>
    %37 = vector.extract_strided_slice %35 {offsets = [8, 0], sizes = [8, 63], strides = [1, 1]} : vector<16x63xf32> to vector<8x63xf32>
    %38 = tpu.concatenate %36, %37 in 1 : vector<8x63xf32>, vector<8x63xf32> -> vector<8x126xf32>
    %c0_8 = arith.constant 0 : index
    %c0_9 = arith.constant 0 : index
    %39 = vector.load %arg4[%c0_8, %c0_9] : memref<126x130xf32, #tpu.memory_space<vmem>>, vector<126x130xf32>
    %cst_10 = arith.constant dense<0.000000e+00> : vector<8x130xf32>
    %40 = tpu.matmul %38, %39, %cst_10 {dimension_numbers = #tpu.dot_dimension_numbers<[1], [0], [0], [1], [0, 0, 1, 1], [], []>} : vector<8x126xf32>, vector<126x130xf32>, vector<8x130xf32> -> vector<8x130xf32>
    %c0_11 = arith.constant 0 : index
    %c0_12 = arith.constant 0 : index
    %41 = vector.load %arg5[%c0_11, %c0_12] : memref<8x130xf32, #tpu.memory_space<vmem>>, vector<8x130xf32>
    %42 = arith.addf %40, %41 : vector<8x130xf32>
    %cst_13 = arith.constant 0.000000e+00 : f32
    %43 = vector.broadcast %cst_13 : f32 to vector<8x130xf32>
    %44 = arith.cmpf oge, %42, %43 : vector<8x130xf32>
    %cst_14 = arith.constant 2.000000e-01 : f32
    %45 = vector.broadcast %cst_14 : f32 to vector<8x130xf32>
    %46 = arith.mulf %45, %42 : vector<8x130xf32>
    %47 = arith.select %44, %42, %46 : vector<8x130xi1>, vector<8x130xf32>
    %c0_15 = arith.constant 0 : index
    %c0_16 = arith.constant 0 : index
    %48 = vector.load %arg6[%c0_15, %c0_16] : memref<32x24xf32, #tpu.memory_space<vmem>>, vector<32x24xf32>
    %49 = vector.extract_strided_slice %47 {offsets = [0, 2], sizes = [8, 128], strides = [1, 1]} : vector<8x130xf32> to vector<8x128xf32>
    %50 = vector.extract_strided_slice %47 {offsets = [0, 1], sizes = [8, 128], strides = [1, 1]} : vector<8x130xf32> to vector<8x128xf32>
    %51 = vector.extract_strided_slice %47 {offsets = [0, 0], sizes = [8, 128], strides = [1, 1]} : vector<8x130xf32> to vector<8x128xf32>
    %52 = tpu.concatenate %49, %50, %51 in 0 : vector<8x128xf32>, vector<8x128xf32>, vector<8x128xf32> -> vector<24x128xf32>
    %cst_17 = arith.constant dense<0.000000e+00> : vector<32x128xf32>
    %53 = tpu.matmul %48, %52, %cst_17 {dimension_numbers = #tpu.dot_dimension_numbers<[1], [0], [0], [1], [0, 0, 1, 1], [], []>} : vector<32x24xf32>, vector<24x128xf32>, vector<32x128xf32> -> vector<32x128xf32>
    %c0_18 = arith.constant 0 : index
    %c0_19 = arith.constant 0 : index
    %54 = vector.load %arg7[%c0_18, %c0_19] : memref<32x1xf32, #tpu.memory_space<vmem>>, vector<32x1xf32>
    %55 = vector.broadcast %54 : vector<32x1xf32> to vector<32x128xf32>
    %56 = arith.addf %53, %55 : vector<32x128xf32>
    %cst_20 = arith.constant 0.000000e+00 : f32
    %57 = vector.broadcast %cst_20 : f32 to vector<32x128xf32>
    %58 = arith.cmpf oge, %56, %57 : vector<32x128xf32>
    %cst_21 = arith.constant 2.000000e-01 : f32
    %59 = vector.broadcast %cst_21 : f32 to vector<32x128xf32>
    %60 = arith.mulf %59, %56 : vector<32x128xf32>
    %61 = arith.select %58, %56, %60 : vector<32x128xi1>, vector<32x128xf32>
    %c0_22 = arith.constant 0 : index
    %c0_23 = arith.constant 0 : index
    %62 = vector.load %arg8[%c0_22, %c0_23] : memref<32x128xf32, #tpu.memory_space<vmem>>, vector<32x128xf32>
    %63 = arith.mulf %61, %62 : vector<32x128xf32>
    %cst_24 = arith.constant 0.000000e+00 : f32
    %64 = vector.broadcast %cst_24 : f32 to vector<32x1xf32>
    %65 = vector.extract_strided_slice %63 {offsets = [0, 0], sizes = [32, 127], strides = [1, 1]} : vector<32x128xf32> to vector<32x127xf32>
    %66 = tpu.concatenate %64, %65 in 1 : vector<32x1xf32>, vector<32x127xf32> -> vector<32x128xf32>
    %67 = vector.extract_strided_slice %63 {offsets = [0, 1], sizes = [32, 127], strides = [1, 1]} : vector<32x128xf32> to vector<32x127xf32>
    %68 = tpu.concatenate %67, %64 in 1 : vector<32x127xf32>, vector<32x1xf32> -> vector<32x128xf32>
    %c0_25 = arith.constant 0 : index
    %c0_26 = arith.constant 0 : index
    %69 = vector.load %arg9[%c0_25, %c0_26] : memref<192x32xf32, #tpu.memory_space<vmem>>, vector<192x32xf32>
    %70 = vector.extract_strided_slice %69 {offsets = [64, 0], sizes = [64, 32], strides = [1, 1]} : vector<192x32xf32> to vector<64x32xf32>
    %cst_27 = arith.constant dense<0.000000e+00> : vector<64x128xf32>
    %71 = tpu.matmul %70, %63, %cst_27 {dimension_numbers = #tpu.dot_dimension_numbers<[1], [0], [0], [1], [0, 0, 1, 1], [], []>} : vector<64x32xf32>, vector<32x128xf32>, vector<64x128xf32> -> vector<64x128xf32>
    %72 = vector.extract_strided_slice %69 {offsets = [0, 0], sizes = [64, 32], strides = [1, 1]} : vector<192x32xf32> to vector<64x32xf32>
    %cst_28 = arith.constant dense<0.000000e+00> : vector<64x128xf32>
    %73 = tpu.matmul %72, %66, %cst_28 {dimension_numbers = #tpu.dot_dimension_numbers<[1], [0], [0], [1], [0, 0, 1, 1], [], []>} : vector<64x32xf32>, vector<32x128xf32>, vector<64x128xf32> -> vector<64x128xf32>
    %74 = arith.addf %71, %73 : vector<64x128xf32>
    %75 = vector.extract_strided_slice %69 {offsets = [128, 0], sizes = [64, 32], strides = [1, 1]} : vector<192x32xf32> to vector<64x32xf32>
    %cst_29 = arith.constant dense<0.000000e+00> : vector<64x128xf32>
    %76 = tpu.matmul %75, %68, %cst_29 {dimension_numbers = #tpu.dot_dimension_numbers<[1], [0], [0], [1], [0, 0, 1, 1], [], []>} : vector<64x32xf32>, vector<32x128xf32>, vector<64x128xf32> -> vector<64x128xf32>
    %77 = arith.addf %74, %76 : vector<64x128xf32>
    %c0_30 = arith.constant 0 : index
    %c0_31 = arith.constant 0 : index
    %78 = vector.load %arg10[%c0_30, %c0_31] : memref<64x1xf32, #tpu.memory_space<vmem>>, vector<64x1xf32>
    %79 = vector.broadcast %78 : vector<64x1xf32> to vector<64x128xf32>
    %80 = arith.addf %77, %79 : vector<64x128xf32>
    %81 = math.tanh %80 : vector<64x128xf32>
    %c0_32 = arith.constant 0 : index
    %c0_33 = arith.constant 0 : index
    %82 = vector.load %arg11[%c0_32, %c0_33] : memref<64x128xf32, #tpu.memory_space<vmem>>, vector<64x128xf32>
    tpu.vector_store %arg11[%c0_32, %c0_33], %81 {strides = array<i32>} : memref<64x128xf32, #tpu.memory_space<vmem>>, vector<64x128xf32>,
    return
  }
}

</mosaic_0001>

<llo_original>
// kernel: fwd.1
$region0: #{fwd.1}
  #allocation0 [shape = 'u32[]', space=smem, size = 0x4, offset = 0x4, fixed_abs, tag = 'smem constant byte address 0x4 - core index']
  #allocation1 [shape = 'u32[144,128]{1,0:T(1,128)}', space=vmem, size = 0x12000, scoped, tag = 'internal scratch']
  %s0 = inlined_call_operand.vmem [shape: f32[2,16], index: 0, kind: input, shape index: {}]
  %s1 = inlined_call_operand.vmem [shape: f32[16,256], index: 1, kind: input, shape index: {}]
  %s2 = inlined_call_operand.vmem [shape: f32[1,256], index: 2, kind: input, shape index: {}]
  %s3 = inlined_call_operand.vmem [shape: f32[16,16], index: 3, kind: input, shape index: {}]
  %s4 = inlined_call_operand.vmem [shape: f32[126,130], index: 4, kind: input, shape index: {}]
  %s5 = inlined_call_operand.vmem [shape: f32[8,130], index: 5, kind: input, shape index: {}]
  %s6 = inlined_call_operand.vmem [shape: f32[32,24], index: 6, kind: input, shape index: {}]
  %s7 = inlined_call_operand.vmem [shape: f32[32,1], index: 7, kind: input, shape index: {}]
  %s8 = inlined_call_operand.vmem [shape: f32[32,128], index: 8, kind: input, shape index: {}]
  %s9 = inlined_call_operand.vmem [shape: f32[192,32], index: 9, kind: input, shape index: {}]
  %s10 = inlined_call_operand.vmem [shape: f32[64,1], index: 10, kind: input, shape index: {}]
  %s11 = inlined_call_operand.vmem [shape: f32[64,128], index: 11, kind: output, shape index: {}]
  %s12 = sld [smem:[#allocation0]]
  $region54: #{fwd.1} parent=0
    _
  %s14 = ssub.s32 1, %s12
  %s15 = scalar_select 0, %s14, %s12
  // Predicated region
  $region2: #{fwd.1} parent=0 // pred_check
    _
  $region3: #{fwd.1} parent=0 // pred_check_branch
    %17 = sbr.rel (0) target = $region5
  $region4: #{fwd.1} parent=0 // pred_region
    _
  $region5: #{fwd.1} parent=0 // pred_fallthru
    _
  // Predicated region
  $region6: #{fwd.1} parent=0 // pred_check
    _
  $region7: #{fwd.1} parent=0 // pred_check_branch
    %19 = sbr.rel (0) target = $region9
  $region8: #{fwd.1} parent=0 // pred_region
    _
  $region9: #{fwd.1} parent=0 // pred_fallthru
    _
  // Predicated region
  $region10: #{fwd.1} parent=0 // pred_check
    _
  $region11: #{fwd.1} parent=0 // pred_check_branch
    %21 = sbr.rel (0) target = $region13
  $region12: #{fwd.1} parent=0 // pred_region
    _
  $region13: #{fwd.1} parent=0 // pred_fallthru
    _
  // Predicated region
  $region14: #{fwd.1} parent=0 // pred_check
    _
  $region15: #{fwd.1} parent=0 // pred_check_branch
    %23 = sbr.rel (0) target = $region17
  $region16: #{fwd.1} parent=0 // pred_region
    _
  $region17: #{fwd.1} parent=0 // pred_fallthru
    _
  // Predicated region
  $region18: #{fwd.1} parent=0 // pred_check
    _
  $region19: #{fwd.1} parent=0 // pred_check_branch
    %25 = sbr.rel (0) target = $region21
  $region20: #{fwd.1} parent=0 // pred_region
    _
  $region21: #{fwd.1} parent=0 // pred_fallthru
    _
  // Predicated region
  $region22: #{fwd.1} parent=0 // pred_check
    _
  $region23: #{fwd.1} parent=0 // pred_check_branch
    %27 = sbr.rel (0) target = $region25
  $region24: #{fwd.1} parent=0 // pred_region
    _
  $region25: #{fwd.1} parent=0 // pred_fallthru
    _
  // Predicated region
  $region26: #{fwd.1} parent=0 // pred_check
    _
  $region27: #{fwd.1} parent=0 // pred_check_branch
    %29 = sbr.rel (0) target = $region29
  $region28: #{fwd.1} parent=0 // pred_region
    _
  $region29: #{fwd.1} parent=0 // pred_fallthru
    _
  // Predicated region
  $region30: #{fwd.1} parent=0 // pred_check
    _
  $region31: #{fwd.1} parent=0 // pred_check_branch
    %31 = sbr.rel (0) target = $region33
  $region32: #{fwd.1} parent=0 // pred_region
    _
  $region33: #{fwd.1} parent=0 // pred_fallthru
    _
  // Predicated region
  $region34: #{fwd.1} parent=0 // pred_check
    _
  $region35: #{fwd.1} parent=0 // pred_check_branch
    %33 = sbr.rel (0) target = $region37
  $region36: #{fwd.1} parent=0 // pred_region
    _
  $region37: #{fwd.1} parent=0 // pred_fallthru
    _
  // Predicated region
  $region38: #{fwd.1} parent=0 // pred_check
    _
  $region39: #{fwd.1} parent=0 // pred_check_branch
    %35 = sbr.rel (0) target = $region41
  $region40: #{fwd.1} parent=0 // pred_region
    _
  $region41: #{fwd.1} parent=0 // pred_fallthru
    _
  // Predicated region
  $region42: #{fwd.1} parent=0 // pred_check
    _
  $region43: #{fwd.1} parent=0 // pred_check_branch
    %37 = sbr.rel (0) target = $region45
  $region44: #{fwd.1} parent=0 // pred_region
    _
  $region45: #{fwd.1} parent=0 // pred_fallthru
    _
  %v38 = vld [vmem:[%s0] sm:$0x3]
  %v39 = vld [vmem:[%s1] sm:$0xff]
  %v40 = vld [vmem:[%s1 + $0x8] sm:$0xff]
  %v41 = vld [vmem:[%s1 + $0x10] sm:$0xff]
  %v42 = vld [vmem:[%s1 + $0x18] sm:$0xff]
  %v43 = vld [vmem:[%s2] sm:$0x3]
  %v45 = vlaneseq
  %v46 = vshrl.u32 %v45, 7
  %v47 = vsub.s32 0, %v46
  %v48 = vrot.slane %v43, %v47
  %v49 = vlaneseq
  %v50 = vshrl.u32 %v49, 7
  %v51 = vsub.s32 1, %v50
  %v52 = vrot.slane %v43, %v51
  %vm55 = vcmask 130048
  %v57 = vsel %vm55, %v38, 0
  %59 = vmatprep.subr.mxu0 0.0
  %60 = vmatpush1.msra.mxu0 0.0
  %61 = vmatprep.subr.mxu0 0.0
  %62 = vmatpush1.msra.mxu0 0.0
  %63 = vmatprep.subr.mxu0 0.0
  %64 = vmatpush1.msra.mxu0 0.0
  %65 = vmatprep.subr.mxu0 0.0
  %66 = vmatpush1.msra.mxu0 0.0
  %67 = vmatprep.subr.mxu0 0.0
  %68 = vmatpush1.msra.mxu0 0.0
  %69 = vmatprep.subr.mxu0 0.0
  %70 = vmatpush1.msra.mxu0 0.0
  %71 = vmatprep.subr.mxu0 0.0
  %72 = vmatpush1.msra.mxu0 0.0
  %73 = vmatprep.subr.mxu0 0.0
  %74 = vmatpush1.msra.mxu0 0.0
  %75 = vmatprep.subr.mxu0 0.0
  %76 = vmatpush1.msra.mxu0 0.0
  %77 = vmatprep.subr.mxu0 0.0
  %78 = vmatpush1.msra.mxu0 0.0
  %79 = vmatprep.subr.mxu0 0.0
  %80 = vmatpush1.msra.mxu0 0.0
  %81 = vmatprep.subr.mxu0 0.0
  %82 = vmatpush1.msra.mxu0 0.0
  %83 = vmatprep.subr.mxu0 0.0
  %84 = vmatpush1.msra.mxu0 0.0
  %85 = vmatprep.subr.mxu0 0.0
  %86 = vmatpush1.msra.mxu0 0.0
  %87 = vmatprep.subr.mxu0 %v42
  %88 = vmatpush1.msra.mxu0 %v41
  %89 = vmatprep.subr.mxu0 %v40
  %90 = vmatpush1.msra.mxu0 %v39
  %91 = vmatprep.subr.mxu0 0.0
  %92 = vmatpush2.msra.mxu0 0.0
  %93 = vmatprep.subr.mxu0 0.0
  %94 = vmatpush2.msra.mxu0 0.0
  %95 = vmatprep.subr.mxu0 0.0
  %96 = vmatpush2.msra.mxu0 0.0
  %97 = vmatprep.subr.mxu0 0.0
  %98 = vmatpush2.msra.mxu0 0.0
  %99 = vmatprep.subr.mxu0 0.0
  %100 = vmatpush2.msra.mxu0 0.0
  %101 = vmatprep.subr.mxu0 0.0
  %102 = vmatpush2.msra.mxu0 0.0
  %103 = vmatprep.subr.mxu0 0.0
  %104 = vmatpush2.msra.mxu0 0.0
  %105 = vmatprep.subr.mxu0 0.0
  %106 = vmatpush2.msra.mxu0 0.0
  %107 = vmatprep.subr.mxu0 0.0
  %108 = vmatpush2.msra.mxu0 0.0
  %109 = vmatprep.subr.mxu0 0.0
  %110 = vmatpush2.msra.mxu0 0.0
  %111 = vmatprep.subr.mxu0 0.0
  %112 = vmatpush2.msra.mxu0 0.0
  %113 = vmatprep.subr.mxu0 0.0
  %114 = vmatpush2.msra.mxu0 0.0
  %115 = vmatprep.subr.mxu0 0.0
  %116 = vmatpush2.msra.mxu0 0.0
  %117 = vmatprep.subr.mxu0 0.0
  %118 = vmatpush2.msra.mxu0 0.0
  %119 = vmatprep.subr.mxu0 0.0
  %120 = vmatpush2.msra.mxu0 0.0
  %121 = vmatprep.subr.mxu0 0.0
  %122 = vmatpush2.msra.mxu0 0.0
  %123 = vmatprep.mubr.f32.mxu0 0.0
  %124 = vmatmul.mubr.f32.gmra.mxu0 %v57
  %v125 = vpop.f32.mrf.mxu0
  %v126 = vadd.f32 %v48, %v125
  %v127 = vpop.f32.mrf.mxu0
  %v128 = vadd.f32 %v52, %v127
  %129 = vdwg.mxu0
  %v131 = vrot.slane %v126, 1
  %132 = vrot.lane.b32.xlu0 %v131, 32
  %v133 = vpop.permute.xlu0 %132
  %vm135 = vcmask 261120
  %v136 = vsel %vm135, %v126, %v133
  %137 = vrot.lane.b32.xlu0 %v126, 96
  %v138 = vpop.permute.xlu0 %137
  %v141 = vsel %vm135, %v138, %v131
  %142 = vrot.lane.b32.xlu0 %v126, 64
  %v143 = vpop.permute.xlu0 %142
  %145 = vrot.lane.b32.xlu0 %v131, 96
  %v146 = vpop.permute.xlu0 %145
  %v148 = vsel %vm135, %v143, %v146
  %149 = vrot.lane.b32.xlu0 %v126, 32
  %v150 = vpop.permute.xlu0 %149
  %152 = vrot.lane.b32.xlu0 %v131, 64
  %v153 = vpop.permute.xlu0 %152
  %v155 = vsel %vm135, %v150, %v153
  %v157 = vrot.slane %v128, 1
  %158 = vrot.lane.b32.xlu0 %v157, 32
  %v159 = vpop.permute.xlu0 %158
  %v161 = vsel %vm135, %v128, %v159
  %162 = vrot.lane.b32.xlu0 %v128, 96
  %v163 = vpop.permute.xlu0 %162
  %v166 = vsel %vm135, %v163, %v157
  %167 = vrot.lane.b32.xlu0 %v128, 64
  %v168 = vpop.permute.xlu0 %167
  %170 = vrot.lane.b32.xlu0 %v157, 96
  %v171 = vpop.permute.xlu0 %170
  %v173 = vsel %vm135, %v168, %v171
  %174 = vrot.lane.b32.xlu0 %v128, 32
  %v175 = vpop.permute.xlu0 %174
  %177 = vrot.lane.b32.xlu0 %v157, 64
  %v178 = vpop.permute.xlu0 %177
  %v180 = vsel %vm135, %v175, %v178
  %v182 = vrot.slane %v141, 7
  %v185 = vrot.slane %v148, 6
  %v188 = vrot.slane %v155, 5
  %v191 = vrot.slane %v161, 4
  %v194 = vrot.slane %v166, 3
  %v197 = vrot.slane %v173, 2
  %v200 = vrot.slane %v180, 1
  %vm202 = vcmask 1040384
  %v203 = vsel %vm202, %v136, %v182
  %vm204 = vcmask 1041408
  %v205 = vsel %vm204, %v203, %v185
  %vm206 = vcmask 1042432
  %v207 = vsel %vm206, %v205, %v188
  %vm208 = vcmask 1043456
  %v209 = vsel %vm208, %v207, %v191
  %vm210 = vcmask 1044480
  %v211 = vsel %vm210, %v209, %v194
  %vm212 = vcmask 1045504
  %v213 = vsel %vm212, %v211, %v197
  %vm214 = vcmask 1046528
  %v215 = vsel %vm214, %v213, %v200
  %v216 = vld [vmem:[%s3] sm:$0xff]
  %v217 = vld [vmem:[%s3 + $0x8] sm:$0xff]
  %219 = vrot.lane.b32.xlu0 %v215, 1
  %v220 = vpop.permute.xlu0 %219
  %221 = vrot.lane.b32.xlu0 %v215, 127
  %v222 = vpop.permute.xlu0 %221
  %223 = vrot.lane.b32.xlu0 %v220, 127
  %v224 = vpop.permute.xlu0 %223
  %v228 = vsel %vm55, %v216, 0
  %v231 = vsel %vm55, %v217, 0
  %233 = vmatprep.subr.mxu0 0.0
  %234 = vmatpush1.msra.mxu0 0.0
  %235 = vmatprep.subr.mxu0 0.0
  %236 = vmatpush1.msra.mxu0 0.0
  %237 = vmatprep.subr.mxu0 0.0
  %238 = vmatpush1.msra.mxu0 0.0
  %239 = vmatprep.subr.mxu0 0.0
  %240 = vmatpush1.msra.mxu0 0.0
  %241 = vmatprep.subr.mxu0 0.0
  %242 = vmatpush1.msra.mxu0 0.0
  %243 = vmatprep.subr.mxu0 0.0
  %244 = vmatpush1.msra.mxu0 0.0
  %245 = vmatprep.subr.mxu0 0.0
  %246 = vmatpush1.msra.mxu0 0.0
  %247 = vmatprep.subr.mxu0 0.0
  %248 = vmatpush1.msra.mxu0 0.0
  %249 = vmatprep.subr.mxu0 0.0
  %250 = vmatpush1.msra.mxu0 0.0
  %251 = vmatprep.subr.mxu0 0.0
  %252 = vmatpush1.msra.mxu0 0.0
  %253 = vmatprep.subr.mxu0 0.0
  %254 = vmatpush1.msra.mxu0 0.0
  %255 = vmatprep.subr.mxu0 0.0
  %256 = vmatpush1.msra.mxu0 0.0
  %257 = vmatprep.subr.mxu0 0.0
  %258 = vmatpush1.msra.mxu0 0.0
  %259 = vmatprep.subr.mxu0 0.0
  %260 = vmatpush1.msra.mxu0 0.0
  %261 = vmatprep.subr.mxu0 0.0
  %262 = vmatpush1.msra.mxu0 %v224
  %263 = vmatprep.subr.mxu0 0.0
  %264 = vmatpush1.msra.mxu0 %v222
  %265 = vmatprep.subr.mxu0 0.0
  %266 = vmatpush2.msra.mxu0 0.0
  %267 = vmatprep.subr.mxu0 0.0
  %268 = vmatpush2.msra.mxu0 0.0
  %269 = vmatprep.subr.mxu0 0.0
  %270 = vmatpush2.msra.mxu0 0.0
  %271 = vmatprep.subr.mxu0 0.0
  %272 = vmatpush2.msra.mxu0 0.0
  %273 = vmatprep.subr.mxu0 0.0
  %274 = vmatpush2.msra.mxu0 0.0
  %275 = vmatprep.subr.mxu0 0.0
  %276 = vmatpush2.msra.mxu0 0.0
  %277 = vmatprep.subr.mxu0 0.0
  %278 = vmatpush2.msra.mxu0 0.0
  %279 = vmatprep.subr.mxu0 0.0
  %280 = vmatpush2.msra.mxu0 0.0
  %281 = vmatprep.subr.mxu0 0.0
  %282 = vmatpush2.msra.mxu0 0.0
  %283 = vmatprep.subr.mxu0 0.0
  %284 = vmatpush2.msra.mxu0 0.0
  %285 = vmatprep.subr.mxu0 0.0
  %286 = vmatpush2.msra.mxu0 0.0
  %287 = vmatprep.subr.mxu0 0.0
  %288 = vmatpush2.msra.mxu0 0.0
  %289 = vmatprep.subr.mxu0 0.0
  %290 = vmatpush2.msra.mxu0 0.0
  %291 = vmatprep.subr.mxu0 0.0
  %292 = vmatpush2.msra.mxu0 0.0
  %293 = vmatprep.subr.mxu0 0.0
  %294 = vmatpush2.msra.mxu0 0.0
  %295 = vmatprep.subr.mxu0 0.0
  %296 = vmatpush2.msra.mxu0 0.0
  %297 = vmatprep.mubr.f32.mxu0 0.0
  %298 = vmatmul.mubr.f32.gmra.mxu0 %v228
  %v299 = vpop.f32.mrf.mxu0
  %v300 = vadd.f32 0.0, %v299
  %v301 = vpop.f32.mrf.mxu0
  %302 = vmatprep.mubr.f32.mxu0 0.0
  %303 = vmatmul.mubr.f32.gmra.mxu0 %v231
  %v304 = vpop.f32.mrf.mxu0
  %v305 = vadd.f32 0.0, %v304
  %v306 = vpop.f32.mrf.mxu0
  %307 = vdwg.mxu0
  %309 = vrot.lane.b32.xlu0 %v305, 63
  %v310 = vpop.permute.xlu0 %309
  %vm312 = vcmask 515072
  %v313 = vsel %vm312, %v300, %v310
  %v314 = vld [vmem:[%s4] sm:$0xff]
  %v315 = vld [vmem:[%s4 + $0x8] sm:$0xff]
  %v316 = vld [vmem:[%s4 + $0x10] sm:$0xff]
  %v317 = vld [vmem:[%s4 + $0x18] sm:$0xff]
  %v318 = vld [vmem:[%s4 + $0x20] sm:$0xff]
  %v319 = vld [vmem:[%s4 + $0x28] sm:$0xff]
  %v320 = vld [vmem:[%s4 + $0x30] sm:$0xff]
  %v321 = vld [vmem:[%s4 + $0x38] sm:$0xff]
  %v322 = vld [vmem:[%s4 + $0x40] sm:$0xff]
  %v323 = vld [vmem:[%s4 + $0x48] sm:$0xff]
  %v324 = vld [vmem:[%s4 + $0x50] sm:$0xff]
  %v325 = vld [vmem:[%s4 + $0x58] sm:$0xff]
  %v326 = vld [vmem:[%s4 + $0x60] sm:$0xff]
  %v327 = vld [vmem:[%s4 + $0x68] sm:$0xff]
  %v328 = vld [vmem:[%s4 + $0x70] sm:$0xff]
  %v329 = vld [vmem:[%s4 + $0x78] sm:$0xff]
  %v330 = vld [vmem:[%s4 + $0x80] sm:$0xff]
  %v331 = vld [vmem:[%s4 + $0x88] sm:$0xff]
  %v332 = vld [vmem:[%s4 + $0x90] sm:$0xff]
  %v333 = vld [vmem:[%s4 + $0x98] sm:$0xff]
  %v334 = vld [vmem:[%s4 + $0xa0] sm:$0xff]
  %v335 = vld [vmem:[%s4 + $0xa8] sm:$0xff]
  %v336 = vld [vmem:[%s4 + $0xb0] sm:$0xff]
  %v337 = vld [vmem:[%s4 + $0xb8] sm:$0xff]
  %v338 = vld [vmem:[%s4 + $0xc0] sm:$0xff]
  %v339 = vld [vmem:[%s4 + $0xc8] sm:$0xff]
  %v340 = vld [vmem:[%s4 + $0xd0] sm:$0xff]
  %v341 = vld [vmem:[%s4 + $0xd8] sm:$0xff]
  %v342 = vld [vmem:[%s4 + $0xe0] sm:$0xff]
  %v343 = vld [vmem:[%s4 + $0xe8] sm:$0xff]
  %v344 = vld [vmem:[%s4 + $0xf0] sm:$0x3f]
  %v345 = vld [vmem:[%s4 + $0xf8] sm:$0x3f]
  %v346 = vld [vmem:[%s5] sm:$0xff]
  %v347 = vld [vmem:[%s5 + $0x8] sm:$0xff]
  %vm348 = vcmask 1031168
  %v350 = vsel %vm348, %v313, 0
  %v353 = vsel %vm212, %v344, 0
  %v356 = vsel %vm212, %v345, 0
  %358 = vmatprep.subr.mxu0 %v356
  %359 = vmatpush1.msra.mxu0 %v353
  %360 = vmatprep.subr.mxu0 %v343
  %361 = vmatpush1.msra.mxu0 %v342
  %362 = vmatprep.subr.mxu0 %v341
  %363 = vmatpush1.msra.mxu0 %v340
  %364 = vmatprep.subr.mxu0 %v339
  %365 = vmatpush1.msra.mxu0 %v338
  %366 = vmatprep.subr.mxu0 %v337
  %367 = vmatpush1.msra.mxu0 %v336
  %368 = vmatprep.subr.mxu0 %v335
  %369 = vmatpush1.msra.mxu0 %v334
  %370 = vmatprep.subr.mxu0 %v333
  %371 = vmatpush1.msra.mxu0 %v332
  %372 = vmatprep.subr.mxu0 %v331
  %373 = vmatpush1.msra.mxu0 %v330
  %374 = vmatprep.subr.mxu0 %v329
  %375 = vmatpush1.msra.mxu0 %v328
  %376 = vmatprep.subr.mxu0 %v327
  %377 = vmatpush1.msra.mxu0 %v326
  %378 = vmatprep.subr.mxu0 %v325
  %379 = vmatpush1.msra.mxu0 %v324
  %380 = vmatprep.subr.mxu0 %v323
  %381 = vmatpush1.msra.mxu0 %v322
  %382 = vmatprep.subr.mxu0 %v321
  %383 = vmatpush1.msra.mxu0 %v320
  %384 = vmatprep.subr.mxu0 %v319
  %385 = vmatpush1.msra.mxu0 %v318
  %386 = vmatprep.subr.mxu0 %v317
  %387 = vmatpush1.msra.mxu0 %v316
  %388 = vmatprep.subr.mxu0 %v315
  %389 = vmatpush1.msra.mxu0 %v314
  %390 = vmatprep.subr.mxu0 0.0
  %391 = vmatpush2.msra.mxu0 0.0
  %392 = vmatprep.subr.mxu0 0.0
  %393 = vmatpush2.msra.mxu0 0.0
  %394 = vmatprep.subr.mxu0 0.0
  %395 = vmatpush2.msra.mxu0 0.0
  %396 = vmatprep.subr.mxu0 0.0
  %397 = vmatpush2.msra.mxu0 0.0
  %398 = vmatprep.subr.mxu0 0.0
  %399 = vmatpush2.msra.mxu0 0.0
  %400 = vmatprep.subr.mxu0 0.0
  %401 = vmatpush2.msra.mxu0 0.0
  %402 = vmatprep.subr.mxu0 0.0
  %403 = vmatpush2.msra.mxu0 0.0
  %404 = vmatprep.subr.mxu0 0.0
  %405 = vmatpush2.msra.mxu0 0.0
  %406 = vmatprep.subr.mxu0 0.0
  %407 = vmatpush2.msra.mxu0 0.0
  %408 = vmatprep.subr.mxu0 0.0
  %409 = vmatpush2.msra.mxu0 0.0
  %410 = vmatprep.subr.mxu0 0.0
  %411 = vmatpush2.msra.mxu0 0.0
  %412 = vmatprep.subr.mxu0 0.0
  %413 = vmatpush2.msra.mxu0 0.0
  %414 = vmatprep.subr.mxu0 0.0
  %415 = vmatpush2.msra.mxu0 0.0
  %416 = vmatprep.subr.mxu0 0.0
  %417 = vmatpush2.msra.mxu0 0.0
  %418 = vmatprep.subr.mxu0 0.0
  %419 = vmatpush2.msra.mxu0 0.0
  %420 = vmatprep.subr.mxu0 0.0
  %421 = vmatpush2.msra.mxu0 0.0
  %422 = vmatprep.mubr.f32.mxu0 0.0
  %423 = vmatmul.mubr.f32.gmra.mxu0 %v350
  %v424 = vpop.f32.mrf.mxu0
  %v425 = vadd.f32 %v346, %v424
  %v426 = vpop.f32.mrf.mxu0
  %v427 = vadd.f32 %v347, %v426
  %428 = vdwg.mxu0
  %vm429 = vcmp.ge.f32.partialorder %v425, 0.0
  %vm430 = vcmp.ge.f32.partialorder %v427, 0.0
  %v431 = vmul.f32 %v425, 0.2
  %v432 = vmul.f32 %v427, 0.2
  %v433 = vsel %vm429, %v425, %v431
  %v434 = vsel %vm430, %v427, %v432
  %v435 = vld [vmem:[%s6] sm:$0xff]
  %v436 = vld [vmem:[%s6 + $0x8] sm:$0xff]
  %v437 = vld [vmem:[%s6 + $0x10] sm:$0xff]
  %v438 = vld [vmem:[%s6 + $0x18] sm:$0xff]
  %441 = vrot.lane.b32.xlu0 %v433, 1
  %v442 = vpop.permute.xlu0 %441
  %443 = vrot.lane.b32.xlu0 %v434, 1
  %v444 = vpop.permute.xlu0 %443
  %vm445 = vcmask 7168
  %v446 = vsel %vm445, %v442, %v444
  %447 = vrot.lane.b32.xlu0 %v433, 2
  %v448 = vpop.permute.xlu0 %447
  %v449 = vld [vmem:[%s7] sm:$0xff]
  %v450 = vld [vmem:[%s7 + $0x8] sm:$0xff]
  %v451 = vld [vmem:[%s7 + $0x10] sm:$0xff]
  %v452 = vld [vmem:[%s7 + $0x18] sm:$0xff]
  %454 = vset.pattern.permute.xlu0 0
  %455 = vperm.xlu0 %454, %v449
  %v456 = vpop.permute.xlu0 %455
  %459 = vset.pattern.permute.xlu0 0
  %460 = vperm.xlu0 %459, %v450
  %v461 = vpop.permute.xlu0 %460
  %464 = vset.pattern.permute.xlu0 0
  %465 = vperm.xlu0 %464, %v451
  %v466 = vpop.permute.xlu0 %465
  %469 = vset.pattern.permute.xlu0 0
  %470 = vperm.xlu0 %469, %v452
  %v471 = vpop.permute.xlu0 %470
  %473 = vrot.lane.b32.xlu0 %v433, 126
  %v474 = vpop.permute.xlu0 %473
  %475 = vrot.lane.b32.xlu0 %v434, 126
  %v476 = vpop.permute.xlu0 %475
  %477 = vrot.lane.b32.xlu0 %v442, 126
  %v478 = vpop.permute.xlu0 %477
  %479 = vrot.lane.b32.xlu0 %v446, 126
  %v480 = vpop.permute.xlu0 %479
  %481 = vrot.lane.b32.xlu0 %v448, 126
  %v482 = vpop.permute.xlu0 %481
  %v483 = vsel %vm348, %v474, %v476
  %v484 = vsel %vm348, %v478, %v480
  %vm488 = vcmask 195584
  %v490 = vsel %vm488, %v435, 0
  %v493 = vsel %vm488, %v436, 0
  %v496 = vsel %vm488, %v437, 0
  %v499 = vsel %vm488, %v438, 0
  %501 = vmatprep.subr.mxu0 0.0
  %502 = vmatpush1.msra.mxu0 0.0
  %503 = vmatprep.subr.mxu0 0.0
  %504 = vmatpush1.msra.mxu0 0.0
  %505 = vmatprep.subr.mxu0 0.0
  %506 = vmatpush1.msra.mxu0 0.0
  %507 = vmatprep.subr.mxu0 0.0
  %508 = vmatpush1.msra.mxu0 0.0
  %509 = vmatprep.subr.mxu0 0.0
  %510 = vmatpush1.msra.mxu0 0.0
  %511 = vmatprep.subr.mxu0 0.0
  %512 = vmatpush1.msra.mxu0 0.0
  %513 = vmatprep.subr.mxu0 0.0
  %514 = vmatpush1.msra.mxu0 0.0
  %515 = vmatprep.subr.mxu0 0.0
  %516 = vmatpush1.msra.mxu0 0.0
  %517 = vmatprep.subr.mxu0 0.0
  %518 = vmatpush1.msra.mxu0 0.0
  %519 = vmatprep.subr.mxu0 0.0
  %520 = vmatpush1.msra.mxu0 0.0
  %521 = vmatprep.subr.mxu0 0.0
  %522 = vmatpush1.msra.mxu0 0.0
  %523 = vmatprep.subr.mxu0 0.0
  %524 = vmatpush1.msra.mxu0 0.0
  %525 = vmatprep.subr.mxu0 0.0
  %526 = vmatpush1.msra.mxu0 0.0
  %527 = vmatprep.subr.mxu0 0.0
  %528 = vmatpush1.msra.mxu0 %v482
  %529 = vmatprep.subr.mxu0 0.0
  %530 = vmatpush1.msra.mxu0 %v484
  %531 = vmatprep.subr.mxu0 0.0
  %532 = vmatpush1.msra.mxu0 %v483
  %533 = vmatprep.subr.mxu0 0.0
  %534 = vmatpush2.msra.mxu0 0.0
  %535 = vmatprep.subr.mxu0 0.0
  %536 = vmatpush2.msra.mxu0 0.0
  %537 = vmatprep.subr.mxu0 0.0
  %538 = vmatpush2.msra.mxu0 0.0
  %539 = vmatprep.subr.mxu0 0.0
  %540 = vmatpush2.msra.mxu0 0.0
  %541 = vmatprep.subr.mxu0 0.0
  %542 = vmatpush2.msra.mxu0 0.0
  %543 = vmatprep.subr.mxu0 0.0
  %544 = vmatpush2.msra.mxu0 0.0
  %545 = vmatprep.subr.mxu0 0.0
  %546 = vmatpush2.msra.mxu0 0.0
  %547 = vmatprep.subr.mxu0 0.0
  %548 = vmatpush2.msra.mxu0 0.0
  %549 = vmatprep.subr.mxu0 0.0
  %550 = vmatpush2.msra.mxu0 0.0
  %551 = vmatprep.subr.mxu0 0.0
  %552 = vmatpush2.msra.mxu0 0.0
  %553 = vmatprep.subr.mxu0 0.0
  %554 = vmatpush2.msra.mxu0 0.0
  %555 = vmatprep.subr.mxu0 0.0
  %556 = vmatpush2.msra.mxu0 0.0
  %557 = vmatprep.subr.mxu0 0.0
  %558 = vmatpush2.msra.mxu0 0.0
  %559 = vmatprep.subr.mxu0 0.0
  %560 = vmatpush2.msra.mxu0 0.0
  %561 = vmatprep.subr.mxu0 0.0
  %562 = vmatpush2.msra.mxu0 0.0
  %563 = vmatprep.subr.mxu0 0.0
  %564 = vmatpush2.msra.mxu0 0.0
  %565 = vmatprep.mubr.f32.mxu0 0.0
  %566 = vmatmul.mubr.f32.gmra.mxu0 %v490
  %v567 = vpop.f32.mrf.mxu0
  %v568 = vadd.f32 %v456, %v567
  %v569 = vpop.f32.mrf.mxu0
  %570 = vmatprep.mubr.f32.mxu0 0.0
  %571 = vmatmul.mubr.f32.gmra.mxu0 %v493
  %v572 = vpop.f32.mrf.mxu0
  %v573 = vadd.f32 %v461, %v572
  %v574 = vpop.f32.mrf.mxu0
  %575 = vmatprep.mubr.f32.mxu0 0.0
  %576 = vmatmul.mubr.f32.gmra.mxu0 %v496
  %v577 = vpop.f32.mrf.mxu0
  %v578 = vadd.f32 %v466, %v577
  %v579 = vpop.f32.mrf.mxu0
  %580 = vmatprep.mubr.f32.mxu0 0.0
  %581 = vmatmul.mubr.f32.gmra.mxu0 %v499
  %v582 = vpop.f32.mrf.mxu0
  %v583 = vadd.f32 %v471, %v582
  %v584 = vpop.f32.mrf.mxu0
  %585 = vdwg.mxu0
  %vm586 = vcmp.ge.f32.partialorder %v568, 0.0
  %vm587 = vcmp.ge.f32.partialorder %v573, 0.0
  %vm588 = vcmp.ge.f32.partialorder %v578, 0.0
  %vm589 = vcmp.ge.f32.partialorder %v583, 0.0
  %v590 = vmul.f32 %v568, 0.2
  %v591 = vmul.f32 %v573, 0.2
  %v592 = vmul.f32 %v578, 0.2
  %v593 = vmul.f32 %v583, 0.2
  %v594 = vsel %vm586, %v568, %v590
  %v595 = vsel %vm587, %v573, %v591
  %v596 = vsel %vm588, %v578, %v592
  %v597 = vsel %vm589, %v583, %v593
  %v598 = vld [vmem:[%s8] sm:$0xff]
  %v599 = vld [vmem:[%s8 + $0x8] sm:$0xff]
  %v600 = vld [vmem:[%s8 + $0x10] sm:$0xff]
  %v601 = vld [vmem:[%s8 + $0x18] sm:$0xff]
  %v602 = vmul.f32 %v594, %v598
  %v603 = vmul.f32 %v595, %v599
  %v604 = vmul.f32 %v596, %v600
  %v605 = vmul.f32 %v597, %v601
  %610 = vrot.lane.b32.xlu0 %v602, 1
  %v611 = vpop.permute.xlu0 %610
  %612 = vrot.lane.b32.xlu0 %v603, 1
  %v613 = vpop.permute.xlu0 %612
  %614 = vrot.lane.b32.xlu0 %v604, 1
  %v615 = vpop.permute.xlu0 %614
  %616 = vrot.lane.b32.xlu0 %v605, 1
  %v617 = vpop.permute.xlu0 %616
  %v622 = vsel %vm445, 0.0, %v611
  %v623 = vsel %vm445, 0.0, %v613
  %v624 = vsel %vm445, 0.0, %v615
  %v625 = vsel %vm445, 0.0, %v617
  %626 = vrot.lane.b32.xlu0 %v602, 127
  %v627 = vpop.permute.xlu0 %626
  %628 = vrot.lane.b32.xlu0 %v603, 127
  %v629 = vpop.permute.xlu0 %628
  %630 = vrot.lane.b32.xlu0 %v604, 127
  %v631 = vpop.permute.xlu0 %630
  %632 = vrot.lane.b32.xlu0 %v605, 127
  %v633 = vpop.permute.xlu0 %632
  %vm638 = vcmask 1039360
  %v639 = vsel %vm638, %v627, 0.0
  %v640 = vsel %vm638, %v629, 0.0
  %v641 = vsel %vm638, %v631, 0.0
  %v642 = vsel %vm638, %v633, 0.0
  %v643 = vld [vmem:[%s9] sm:$0xff]
  %v644 = vld [vmem:[%s9 + $0x8] sm:$0xff]
  %v645 = vld [vmem:[%s9 + $0x10] sm:$0xff]
  %v646 = vld [vmem:[%s9 + $0x18] sm:$0xff]
  %v647 = vld [vmem:[%s9 + $0x20] sm:$0xff]
  %v648 = vld [vmem:[%s9 + $0x28] sm:$0xff]
  %v649 = vld [vmem:[%s9 + $0x30] sm:$0xff]
  %v650 = vld [vmem:[%s9 + $0x38] sm:$0xff]
  %v651 = vld [vmem:[%s9 + $0x40] sm:$0xff]
  %v652 = vld [vmem:[%s9 + $0x48] sm:$0xff]
  %v653 = vld [vmem:[%s9 + $0x50] sm:$0xff]
  %v654 = vld [vmem:[%s9 + $0x58] sm:$0xff]
  %v655 = vld [vmem:[%s9 + $0x60] sm:$0xff]
  %v656 = vld [vmem:[%s9 + $0x68] sm:$0xff]
  %v657 = vld [vmem:[%s9 + $0x70] sm:$0xff]
  %v658 = vld [vmem:[%s9 + $0x78] sm:$0xff]
  %v659 = vld [vmem:[%s9 + $0x80] sm:$0xff]
  %v660 = vld [vmem:[%s9 + $0x88] sm:$0xff]
  %v661 = vld [vmem:[%s9 + $0x90] sm:$0xff]
  %v662 = vld [vmem:[%s9 + $0x98] sm:$0xff]
  %v663 = vld [vmem:[%s9 + $0xa0] sm:$0xff]
  %v664 = vld [vmem:[%s9 + $0xa8] sm:$0xff]
  %v665 = vld [vmem:[%s9 + $0xb0] sm:$0xff]
  %v666 = vld [vmem:[%s9 + $0xb8] sm:$0xff]
  %v668 = vsel %vm135, %v643, 0
  %v671 = vsel %vm135, %v644, 0
  %v674 = vsel %vm135, %v645, 0
  %v677 = vsel %vm135, %v646, 0
  %v680 = vsel %vm135, %v647, 0
  %v683 = vsel %vm135, %v648, 0
  %v686 = vsel %vm135, %v649, 0
  %v689 = vsel %vm135, %v650, 0
  %691 = vmatprep.subr.mxu0 0.0
  %692 = vmatpush1.msra.mxu0 0.0
  %693 = vmatprep.subr.mxu0 0.0
  %694 = vmatpush1.msra.mxu0 0.0
  %695 = vmatprep.subr.mxu0 0.0
  %696 = vmatpush1.msra.mxu0 0.0
  %697 = vmatprep.subr.mxu0 0.0
  %698 = vmatpush1.msra.mxu0 0.0
  %699 = vmatprep.subr.mxu0 0.0
  %700 = vmatpush1.msra.mxu0 0.0
  %701 = vmatprep.subr.mxu0 0.0
  %702 = vmatpush1.msra.mxu0 0.0
  %703 = vmatprep.subr.mxu0 0.0
  %704 = vmatpush1.msra.mxu0 0.0
  %705 = vmatprep.subr.mxu0 0.0
  %706 = vmatpush1.msra.mxu0 0.0
  %707 = vmatprep.subr.mxu0 0.0
  %708 = vmatpush1.msra.mxu0 0.0
  %709 = vmatprep.subr.mxu0 0.0
  %710 = vmatpush1.msra.mxu0 0.0
  %711 = vmatprep.subr.mxu0 0.0
  %712 = vmatpush1.msra.mxu0 0.0
  %713 = vmatprep.subr.mxu0 0.0
  %714 = vmatpush1.msra.mxu0 0.0
  %715 = vmatprep.subr.mxu0 0.0
  %716 = vmatpush1.msra.mxu0 %v625
  %717 = vmatprep.subr.mxu0 0.0
  %718 = vmatpush1.msra.mxu0 %v624
  %719 = vmatprep.subr.mxu0 0.0
  %720 = vmatpush1.msra.mxu0 %v623
  %721 = vmatprep.subr.mxu0 0.0
  %722 = vmatpush1.msra.mxu0 %v622
  %723 = vmatprep.subr.mxu0 0.0
  %724 = vmatpush2.msra.mxu0 0.0
  %725 = vmatprep.subr.mxu0 0.0
  %726 = vmatpush2.msra.mxu0 0.0
  %727 = vmatprep.subr.mxu0 0.0
  %728 = vmatpush2.msra.mxu0 0.0
  %729 = vmatprep.subr.mxu0 0.0
  %730 = vmatpush2.msra.mxu0 0.0
  %731 = vmatprep.subr.mxu0 0.0
  %732 = vmatpush2.msra.mxu0 0.0
  %733 = vmatprep.subr.mxu0 0.0
  %734 = vmatpush2.msra.mxu0 0.0
  %735 = vmatprep.subr.mxu0 0.0
  %736 = vmatpush2.msra.mxu0 0.0
  %737 = vmatprep.subr.mxu0 0.0
  %738 = vmatpush2.msra.mxu0 0.0
  %739 = vmatprep.subr.mxu0 0.0
  %740 = vmatpush2.msra.mxu0 0.0
  %741 = vmatprep.subr.mxu0 0.0
  %742 = vmatpush2.msra.mxu0 0.0
  %743 = vmatprep.subr.mxu0 0.0
  %744 = vmatpush2.msra.mxu0 0.0
  %745 = vmatprep.subr.mxu0 0.0
  %746 = vmatpush2.msra.mxu0 0.0
  %747 = vmatprep.subr.mxu0 0.0
  %748 = vmatpush2.msra.mxu0 0.0
  %749 = vmatprep.subr.mxu0 0.0
  %750 = vmatpush2.msra.mxu0 0.0
  %751 = vmatprep.subr.mxu0 0.0
  %752 = vmatpush2.msra.mxu0 0.0
  %753 = vmatprep.subr.mxu0 0.0
  %754 = vmatpush2.msra.mxu0 0.0
  %755 = vmatprep.mubr.f32.mxu0 0.0
  %756 = vmatmul.mubr.f32.gmra.mxu0 %v668
  %v757 = vpop.f32.mrf.mxu0
  %v758 = vadd.f32 0.0, %v757
  %v759 = vpop.f32.mrf.mxu0
  %760 = vmatprep.mubr.f32.mxu0 0.0
  %761 = vmatmul.mubr.f32.gmra.mxu0 %v671
  %v762 = vpop.f32.mrf.mxu0
  %v763 = vadd.f32 0.0, %v762
  %v764 = vpop.f32.mrf.mxu0
  %765 = vmatprep.mubr.f32.mxu0 0.0
  %766 = vmatmul.mubr.f32.gmra.mxu0 %v674
  %v767 = vpop.f32.mrf.mxu0
  %v768 = vadd.f32 0.0, %v767
  %v769 = vpop.f32.mrf.mxu0
  %770 = vmatprep.mubr.f32.mxu0 0.0
  %771 = vmatmul.mubr.f32.gmra.mxu0 %v677
  %v772 = vpop.f32.mrf.mxu0
  %v773 = vadd.f32 0.0, %v772
  %v774 = vpop.f32.mrf.mxu0
  %775 = vmatprep.mubr.f32.mxu0 0.0
  %776 = vmatmul.mubr.f32.gmra.mxu0 %v680
  %v777 = vpop.f32.mrf.mxu0
  %v778 = vadd.f32 0.0, %v777
  %v779 = vpop.f32.mrf.mxu0
  %780 = vmatprep.mubr.f32.mxu0 0.0
  %781 = vmatmul.mubr.f32.gmra.mxu0 %v683
  %v782 = vpop.f32.mrf.mxu0
  %v783 = vadd.f32 0.0, %v782
  %v784 = vpop.f32.mrf.mxu0
  %785 = vmatprep.mubr.f32.mxu0 0.0
  %786 = vmatmul.mubr.f32.gmra.mxu0 %v686
  %v787 = vpop.f32.mrf.mxu0
  %v788 = vadd.f32 0.0, %v787
  %v789 = vpop.f32.mrf.mxu0
  %790 = vmatprep.mubr.f32.mxu0 0.0
  %791 = vmatmul.mubr.f32.gmra.mxu0 %v689
  %v792 = vpop.f32.mrf.mxu0
  %v793 = vadd.f32 0.0, %v792
  %v794 = vpop.f32.mrf.mxu0
  %795 = vdwg.mxu0
  %v797 = vsel %vm135, %v651, 0
  %v800 = vsel %vm135, %v652, 0
  %v803 = vsel %vm135, %v653, 0
  %v806 = vsel %vm135, %v654, 0
  %v809 = vsel %vm135, %v655, 0
  %v812 = vsel %vm135, %v656, 0
  %v815 = vsel %vm135, %v657, 0
  %v818 = vsel %vm135, %v658, 0
  %820 = vmatprep.subr.mxu0 0.0
  %821 = vmatpush1.msra.mxu0 0.0
  %822 = vmatprep.subr.mxu0 0.0
  %823 = vmatpush1.msra.mxu0 0.0
  %824 = vmatprep.subr.mxu0 0.0
  %825 = vmatpush1.msra.mxu0 0.0
  %826 = vmatprep.subr.mxu0 0.0
  %827 = vmatpush1.msra.mxu0 0.0
  %828 = vmatprep.subr.mxu0 0.0
  %829 = vmatpush1.msra.mxu0 0.0
  %830 = vmatprep.subr.mxu0 0.0
  %831 = vmatpush1.msra.mxu0 0.0
  %832 = vmatprep.subr.mxu0 0.0
  %833 = vmatpush1.msra.mxu0 0.0
  %834 = vmatprep.subr.mxu0 0.0
  %835 = vmatpush1.msra.mxu0 0.0
  %836 = vmatprep.subr.mxu0 0.0
  %837 = vmatpush1.msra.mxu0 0.0
  %838 = vmatprep.subr.mxu0 0.0
  %839 = vmatpush1.msra.mxu0 0.0
  %840 = vmatprep.subr.mxu0 0.0
  %841 = vmatpush1.msra.mxu0 0.0
  %842 = vmatprep.subr.mxu0 0.0
  %843 = vmatpush1.msra.mxu0 0.0
  %844 = vmatprep.subr.mxu0 0.0
  %845 = vmatpush1.msra.mxu0 %v605
  %846 = vmatprep.subr.mxu0 0.0
  %847 = vmatpush1.msra.mxu0 %v604
  %848 = vmatprep.subr.mxu0 0.0
  %849 = vmatpush1.msra.mxu0 %v603
  %850 = vmatprep.subr.mxu0 0.0
  %851 = vmatpush1.msra.mxu0 %v602
  %852 = vmatprep.subr.mxu0 0.0
  %853 = vmatpush2.msra.mxu0 0.0
  %854 = vmatprep.subr.mxu0 0.0
  %855 = vmatpush2.msra.mxu0 0.0
  %856 = vmatprep.subr.mxu0 0.0
  %857 = vmatpush2.msra.mxu0 0.0
  %858 = vmatprep.subr.mxu0 0.0
  %859 = vmatpush2.msra.mxu0 0.0
  %860 = vmatprep.subr.mxu0 0.0
  %861 = vmatpush2.msra.mxu0 0.0
  %862 = vmatprep.subr.mxu0 0.0
  %863 = vmatpush2.msra.mxu0 0.0
  %864 = vmatprep.subr.mxu0 0.0
  %865 = vmatpush2.msra.mxu0 0.0
  %866 = vmatprep.subr.mxu0 0.0
  %867 = vmatpush2.msra.mxu0 0.0
  %868 = vmatprep.subr.mxu0 0.0
  %869 = vmatpush2.msra.mxu0 0.0
  %870 = vmatprep.subr.mxu0 0.0
  %871 = vmatpush2.msra.mxu0 0.0
  %872 = vmatprep.subr.mxu0 0.0
  %873 = vmatpush2.msra.mxu0 0.0
  %874 = vmatprep.subr.mxu0 0.0
  %875 = vmatpush2.msra.mxu0 0.0
  %876 = vmatprep.subr.mxu0 0.0
  %877 = vmatpush2.msra.mxu0 0.0
  %878 = vmatprep.subr.mxu0 0.0
  %879 = vmatpush2.msra.mxu0 0.0
  %880 = vmatprep.subr.mxu0 0.0
  %881 = vmatpush2.msra.mxu0 0.0
  %882 = vmatprep.subr.mxu0 0.0
  %883 = vmatpush2.msra.mxu0 0.0
  %884 = vmatprep.mubr.f32.mxu0 0.0
  %885 = vmatmul.mubr.f32.gmra.mxu0 %v797
  %v886 = vpop.f32.mrf.mxu0
  %v887 = vadd.f32 %v758, %v886
  %v888 = vpop.f32.mrf.mxu0
  %889 = vmatprep.mubr.f32.mxu0 0.0
  %890 = vmatmul.mubr.f32.gmra.mxu0 %v800
  %v891 = vpop.f32.mrf.mxu0
  %v892 = vadd.f32 %v763, %v891
  %v893 = vpop.f32.mrf.mxu0
  %894 = vmatprep.mubr.f32.mxu0 0.0
  %895 = vmatmul.mubr.f32.gmra.mxu0 %v803
  %v896 = vpop.f32.mrf.mxu0
  %v897 = vadd.f32 %v768, %v896
  %v898 = vpop.f32.mrf.mxu0
  %899 = vmatprep.mubr.f32.mxu0 0.0
  %900 = vmatmul.mubr.f32.gmra.mxu0 %v806
  %v901 = vpop.f32.mrf.mxu0
  %v902 = vadd.f32 %v773, %v901
  %v903 = vpop.f32.mrf.mxu0
  %904 = vmatprep.mubr.f32.mxu0 0.0
  %905 = vmatmul.mubr.f32.gmra.mxu0 %v809
  %v906 = vpop.f32.mrf.mxu0
  %v907 = vadd.f32 %v778, %v906
  %v908 = vpop.f32.mrf.mxu0
  %909 = vmatprep.mubr.f32.mxu0 0.0
  %910 = vmatmul.mubr.f32.gmra.mxu0 %v812
  %v911 = vpop.f32.mrf.mxu0
  %v912 = vadd.f32 %v783, %v911
  %v913 = vpop.f32.mrf.mxu0
  %914 = vmatprep.mubr.f32.mxu0 0.0
  %915 = vmatmul.mubr.f32.gmra.mxu0 %v815
  %v916 = vpop.f32.mrf.mxu0
  %v917 = vadd.f32 %v788, %v916
  %v918 = vpop.f32.mrf.mxu0
  %919 = vmatprep.mubr.f32.mxu0 0.0
  %920 = vmatmul.mubr.f32.gmra.mxu0 %v818
  %v921 = vpop.f32.mrf.mxu0
  %v922 = vadd.f32 %v793, %v921
  %v923 = vpop.f32.mrf.mxu0
  %924 = vdwg.mxu0
  %v926 = vsel %vm135, %v659, 0
  %v929 = vsel %vm135, %v660, 0
  %v932 = vsel %vm135, %v661, 0
  %v935 = vsel %vm135, %v662, 0
  %v938 = vsel %vm135, %v663, 0
  %v941 = vsel %vm135, %v664, 0
  %v944 = vsel %vm135, %v665, 0
  %v947 = vsel %vm135, %v666, 0
  %949 = vmatprep.subr.mxu0 0.0
  %950 = vmatpush1.msra.mxu0 0.0
  %951 = vmatprep.subr.mxu0 0.0
  %952 = vmatpush1.msra.mxu0 0.0
  %953 = vmatprep.subr.mxu0 0.0
  %954 = vmatpush1.msra.mxu0 0.0
  %955 = vmatprep.subr.mxu0 0.0
  %956 = vmatpush1.msra.mxu0 0.0
  %957 = vmatprep.subr.mxu0 0.0
  %958 = vmatpush1.msra.mxu0 0.0
  %959 = vmatprep.subr.mxu0 0.0
  %960 = vmatpush1.msra.mxu0 0.0
  %961 = vmatprep.subr.mxu0 0.0
  %962 = vmatpush1.msra.mxu0 0.0
  %963 = vmatprep.subr.mxu0 0.0
  %964 = vmatpush1.msra.mxu0 0.0
  %965 = vmatprep.subr.mxu0 0.0
  %966 = vmatpush1.msra.mxu0 0.0
  %967 = vmatprep.subr.mxu0 0.0
  %968 = vmatpush1.msra.mxu0 0.0
  %969 = vmatprep.subr.mxu0 0.0
  %970 = vmatpush1.msra.mxu0 0.0
  %971 = vmatprep.subr.mxu0 0.0
  %972 = vmatpush1.msra.mxu0 0.0
  %973 = vmatprep.subr.mxu0 0.0
  %974 = vmatpush1.msra.mxu0 %v642
  %975 = vmatprep.subr.mxu0 0.0
  %976 = vmatpush1.msra.mxu0 %v641
  %977 = vmatprep.subr.mxu0 0.0
  %978 = vmatpush1.msra.mxu0 %v640
  %979 = vmatprep.subr.mxu0 0.0
  %980 = vmatpush1.msra.mxu0 %v639
  %981 = vmatprep.subr.mxu0 0.0
  %982 = vmatpush2.msra.mxu0 0.0
  %983 = vmatprep.subr.mxu0 0.0
  %984 = vmatpush2.msra.mxu0 0.0
  %985 = vmatprep.subr.mxu0 0.0
  %986 = vmatpush2.msra.mxu0 0.0
  %987 = vmatprep.subr.mxu0 0.0
  %988 = vmatpush2.msra.mxu0 0.0
  %989 = vmatprep.subr.mxu0 0.0
  %990 = vmatpush2.msra.mxu0 0.0
  %991 = vmatprep.subr.mxu0 0.0
  %992 = vmatpush2.msra.mxu0 0.0
  %993 = vmatprep.subr.mxu0 0.0
  %994 = vmatpush2.msra.mxu0 0.0
  %995 = vmatprep.subr.mxu0 0.0
  %996 = vmatpush2.msra.mxu0 0.0
  %997 = vmatprep.subr.mxu0 0.0
  %998 = vmatpush2.msra.mxu0 0.0
  %999 = vmatprep.subr.mxu0 0.0
  %1000 = vmatpush2.msra.mxu0 0.0
  %1001 = vmatprep.subr.mxu0 0.0
  %1002 = vmatpush2.msra.mxu0 0.0
  %1003 = vmatprep.subr.mxu0 0.0
  %1004 = vmatpush2.msra.mxu0 0.0
  %1005 = vmatprep.subr.mxu0 0.0
  %1006 = vmatpush2.msra.mxu0 0.0
  %1007 = vmatprep.subr.mxu0 0.0
  %1008 = vmatpush2.msra.mxu0 0.0
  %1009 = vmatprep.subr.mxu0 0.0
  %1010 = vmatpush2.msra.mxu0 0.0
  %1011 = vmatprep.subr.mxu0 0.0
  %1012 = vmatpush2.msra.mxu0 0.0
  %1013 = vmatprep.mubr.f32.mxu0 0.0
  %1014 = vmatmul.mubr.f32.gmra.mxu0 %v926
  %v1015 = vpop.f32.mrf.mxu0
  %v1016 = vadd.f32 0.0, %v1015
  %v1017 = vpop.f32.mrf.mxu0
  %1018 = vmatprep.mubr.f32.mxu0 0.0
  %1019 = vmatmul.mubr.f32.gmra.mxu0 %v929
  %v1020 = vpop.f32.mrf.mxu0
  %v1021 = vadd.f32 0.0, %v1020
  %v1022 = vpop.f32.mrf.mxu0
  %1023 = vmatprep.mubr.f32.mxu0 0.0
  %1024 = vmatmul.mubr.f32.gmra.mxu0 %v932
  %v1025 = vpop.f32.mrf.mxu0
  %v1026 = vadd.f32 0.0, %v1025
  %v1027 = vpop.f32.mrf.mxu0
  %1028 = vmatprep.mubr.f32.mxu0 0.0
  %1029 = vmatmul.mubr.f32.gmra.mxu0 %v935
  %v1030 = vpop.f32.mrf.mxu0
  %v1031 = vadd.f32 0.0, %v1030
  %v1032 = vpop.f32.mrf.mxu0
  %1033 = vmatprep.mubr.f32.mxu0 0.0
  %1034 = vmatmul.mubr.f32.gmra.mxu0 %v938
  %v1035 = vpop.f32.mrf.mxu0
  %v1036 = vadd.f32 0.0, %v1035
  %v1037 = vpop.f32.mrf.mxu0
  %1038 = vmatprep.mubr.f32.mxu0 0.0
  %1039 = vmatmul.mubr.f32.gmra.mxu0 %v941
  %v1040 = vpop.f32.mrf.mxu0
  %v1041 = vadd.f32 0.0, %v1040
  %v1042 = vpop.f32.mrf.mxu0
  %1043 = vmatprep.mubr.f32.mxu0 0.0
  %1044 = vmatmul.mubr.f32.gmra.mxu0 %v944
  %v1045 = vpop.f32.mrf.mxu0
  %v1046 = vadd.f32 0.0, %v1045
  %v1047 = vpop.f32.mrf.mxu0
  %1048 = vmatprep.mubr.f32.mxu0 0.0
  %1049 = vmatmul.mubr.f32.gmra.mxu0 %v947
  %v1050 = vpop.f32.mrf.mxu0
  %v1051 = vadd.f32 0.0, %v1050
  %v1052 = vpop.f32.mrf.mxu0
  %1053 = vdwg.mxu0
  %v1054 = vadd.f32 %v887, %v1016
  %v1055 = vadd.f32 %v892, %v1021
  %v1056 = vadd.f32 %v897, %v1026
  %v1057 = vadd.f32 %v902, %v1031
  %v1058 = vadd.f32 %v907, %v1036
  %v1059 = vadd.f32 %v912, %v1041
  %v1060 = vadd.f32 %v917, %v1046
  %v1061 = vadd.f32 %v922, %v1051
  %v1062 = vld [vmem:[%s10] sm:$0xff]
  %v1063 = vld [vmem:[%s10 + $0x8] sm:$0xff]
  %v1064 = vld [vmem:[%s10 + $0x10] sm:$0xff]
  %v1065 = vld [vmem:[%s10 + $0x18] sm:$0xff]
  %v1066 = vld [vmem:[%s10 + $0x20] sm:$0xff]
  %v1067 = vld [vmem:[%s10 + $0x28] sm:$0xff]
  %v1068 = vld [vmem:[%s10 + $0x30] sm:$0xff]
  %v1069 = vld [vmem:[%s10 + $0x38] sm:$0xff]
  %1071 = vset.pattern.permute.xlu0 0
  %1072 = vperm.xlu0 %1071, %v1062
  %v1073 = vpop.permute.xlu0 %1072
  %1076 = vset.pattern.permute.xlu0 0
  %1077 = vperm.xlu0 %1076, %v1063
  %v1078 = vpop.permute.xlu0 %1077
  %1081 = vset.pattern.permute.xlu0 0
  %1082 = vperm.xlu0 %1081, %v1064
  %v1083 = vpop.permute.xlu0 %1082
  %1086 = vset.pattern.permute.xlu0 0
  %1087 = vperm.xlu0 %1086, %v1065
  %v1088 = vpop.permute.xlu0 %1087
  %1091 = vset.pattern.permute.xlu0 0
  %1092 = vperm.xlu0 %1091, %v1066
  %v1093 = vpop.permute.xlu0 %1092
  %1096 = vset.pattern.permute.xlu0 0
  %1097 = vperm.xlu0 %1096, %v1067
  %v1098 = vpop.permute.xlu0 %1097
  %1101 = vset.pattern.permute.xlu0 0
  %1102 = vperm.xlu0 %1101, %v1068
  %v1103 = vpop.permute.xlu0 %1102
  %1106 = vset.pattern.permute.xlu0 0
  %1107 = vperm.xlu0 %1106, %v1069
  %v1108 = vpop.permute.xlu0 %1107
  %v1110 = vadd.f32 %v1054, %v1073
  %v1111 = vadd.f32 %v1055, %v1078
  %v1112 = vadd.f32 %v1056, %v1083
  %v1113 = vadd.f32 %v1057, %v1088
  %v1114 = vadd.f32 %v1058, %v1093
  %v1115 = vadd.f32 %v1059, %v1098
  %v1116 = vadd.f32 %v1060, %v1103
  %v1117 = vadd.f32 %v1061, %v1108
  %v1118 = vtanh.pop %v1110
  %v1119 = vtanh.pop %v1111
  %v1120 = vtanh.pop %v1112
  %v1121 = vtanh.pop %v1113
  %v1122 = vtanh.pop %v1114
  %v1123 = vtanh.pop %v1115
  %v1124 = vtanh.pop %v1116
  %v1125 = vtanh.pop %v1117
  %1126 = vst [vmem:[%s11] sm:$0xff] %v1118
  %1127 = vst [vmem:[%s11 + $0x8] sm:$0xff] %v1119
  %1128 = vst [vmem:[%s11 + $0x10] sm:$0xff] %v1120
  %1129 = vst [vmem:[%s11 + $0x18] sm:$0xff] %v1121
  %1130 = vst [vmem:[%s11 + $0x20] sm:$0xff] %v1122
  %1131 = vst [vmem:[%s11 + $0x28] sm:$0xff] %v1123
  %1132 = vst [vmem:[%s11 + $0x30] sm:$0xff] %v1124
  %1133 = vst [vmem:[%s11 + $0x38] sm:$0xff] %v1125
  // Predicated region
  $region46: #{fwd.1} parent=0 // pred_check
    _
  $region47: #{fwd.1} parent=0 // pred_check_branch
    %1135 = sbr.rel (0) target = $region49
  $region48: #{fwd.1} parent=0 // pred_region
    _
  $region49: #{fwd.1} parent=0 // pred_fallthru
    _
  // Predicated region
  $region50: #{fwd.1} parent=0 // pred_check
    _
  $region51: #{fwd.1} parent=0 // pred_check_branch
    %1137 = sbr.rel (0) target = $region53
  $region52: #{fwd.1} parent=0 // pred_region
    _
  $region53: #{fwd.1} parent=0 // pred_fallthru
    _

</llo_original>
